<compile_context>
chip_gen: v5e
topology: v5e:2x2
jax: 0.10.0
libtpu: 0.0.40
codegen_flags: <defaults>
</compile_context>

<pallas_src>
import functools

import jax
import jax.numpy as jnp
from jax import lax
from jax.experimental import pallas as pl
from jax.experimental.pallas import tpu as pltpu


def _cdiv(a, b):
    return -(-a // b)


def _round_up(x, m):
    return ((x + m - 1) // m) * m


def _vmem_capacity_bytes():
    """Generation-aware VMEM capacity; conservative (v7x) fallback."""
    try:
        info = pltpu.get_tpu_info()
        cap = getattr(info, "vmem_capacity_bytes", None)
        if cap:
            return int(cap)
    except Exception:
        pass
    return 64 * 1024 * 1024  # v7x per-TC VMEM (smallest of the targets)


def _as_lane_dense_2d(perm):
    """Flatten (B, N, N) into a lane-dense 2-D view (free reshape)."""
    b, n, _ = perm.shape
    total = b * n * n
    for width in (1024, 512, 256, 128):
        if total % width == 0:
            return perm.reshape(total // width, width)
    # Fallback for awkward sizes: keep the full N*N row as the last dim so
    # lanes stay mostly full (vs (B*N, N), which wastes (128-N)/128 of every
    # vreg when N < 128).  Last dim == full array dim keeps the BlockSpec legal.
    return perm.reshape(b, n * n)


def _entropy_sum_kernel(x_ref, psum_ref, *, eps, tile_rows, rows_in_last,
                        partial_rows, needs_mask):
    # x_ref block: (tile_rows, W).  psum_ref block: (partial_rows, W).
    p = x_ref[...].astype(jnp.float32) + eps
    t = p * jnp.maximum(jnp.log(p), -100.0)  # torch.clamp_min(log(p), -100)
    w = t.shape[-1]

    def _partial(v):
        if partial_rows == 8:
            # Stop the sublane fold at one full vreg row; the remaining x8 fold
            # happens in the tiny JAX epilogue.  Keeps stores unmasked/full.
            return jnp.sum(v.reshape(tile_rows // 8, 8, w), axis=0)
        return jnp.sum(v, axis=0, keepdims=True)

    if needs_mask:
        # Only the last (partial) tile pays for the OOB-row mask; steady-state
        # tiles keep the minimal add/log/max/mul/add chain.
        last = pl.num_programs(0) - 1

        @pl.when(pl.program_id(0) != last)
        def _():
            psum_ref[...] = _partial(t)

        @pl.when(pl.program_id(0) == last)
        def _():
            rows = lax.broadcasted_iota(jnp.int32, (tile_rows, 1), 0)
            # Keep this a select (not multiply-by-mask): log of OOB garbage
            # can be NaN and must be discarded, not propagated.
            psum_ref[...] = _partial(jnp.where(rows < rows_in_last, t, 0.0))
    else:
        psum_ref[...] = _partial(t)


def permutation_matrix_penalty(perm, eps=1e-7):
    """JAX/Pallas equivalent of PermutaionMatrixPenalty.forward (scalar loss)."""
    B, N, N2 = perm.shape
    assert N == N2, "expected square (soft) permutation matrices"

    x = _as_lane_dense_2d(perm)
    R, W = x.shape
    itemsize = int(x.dtype.itemsize)
    padded_w = _round_up(W, 128)

    # --- VMEM-budgeted tile sizing (generation aware) -----------------------
    # Live VMEM per streamed element ~= 2x double-buffered input (itemsize)
    # plus ~2 whole-tile f32 intermediates (p, t) inside the kernel body.
    vmem_cap = _vmem_capacity_bytes()
    live_bytes_per_elem = 2 * itemsize + 2 * 4
    budget = vmem_cap // 2                       # leave half of VMEM headroom
    tile_rows = max(1, budget // (padded_w * live_bytes_per_elem))
    tile_rows = min(tile_rows, R)

    # Sublane pack of the input dtype: 8 (f32), 16 (bf16), 32 (int8/fp8).
    row_align = max(8, 32 // max(1, itemsize))
    if tile_rows >= row_align:
        tile_rows = (tile_rows // row_align) * row_align

    num_tiles = _cdiv(R, tile_rows)
    if num_tiles > 1:
        # v7x shards the "parallel" axis across 2 TensorCores: prefer an even
        # tile count with >= ~4 tiles per core when there is enough data.
        min_tiles = 8
        if num_tiles < min_tiles and R >= min_tiles * row_align:
            num_tiles = min_tiles
        if num_tiles % 2 == 1:
            num_tiles += 1
        tile_rows = min(R, _round_up(_cdiv(R, num_tiles), row_align))
        num_tiles = _cdiv(R, tile_rows)

    rows_in_last = R - (num_tiles - 1) * tile_rows
    needs_mask = (R % tile_rows) != 0
    # (8, W) partials only when both dims stay layout-aligned.
    partial_rows = 8 if (tile_rows % 8 == 0 and W % 128 == 0) else 1

    kernel = functools.partial(
        _entropy_sum_kernel,
        eps=float(eps),
        tile_rows=tile_rows,
        rows_in_last=rows_in_last,
        partial_rows=partial_rows,
        needs_mask=needs_mask,
    )

    cost = pl.CostEstimate(
        flops=4 * R * W,
        transcendentals=R * W,
        bytes_accessed=R * W * itemsize + num_tiles * partial_rows * W * 4,
    )

    partials = pl.pallas_call(
        kernel,
        out_shape=jax.ShapeDtypeStruct((num_tiles * partial_rows, W), jnp.float32),
        grid=(num_tiles,),
        in_specs=[pl.BlockSpec((tile_rows, W), lambda r: (r, 0))],
        out_specs=pl.BlockSpec((partial_rows, W), lambda r: (r, 0)),
        compiler_params=pltpu.CompilerParams(
            dimension_semantics=("parallel",),
            vmem_limit_bytes=int(min(vmem_cap * 3 // 4, 96 * 1024 * 1024)),
        ),
        cost_estimate=cost,
    )(x)

    # Tiny epilogue: fold the (num_tiles*partial_rows, W) partials to a scalar.
    total = jnp.sum(partials, dtype=jnp.float32)
    return (-2.0 / (B * N)) * total


def _reference(perm, eps=1e-7):
    """Pure-JAX reference mirroring the PyTorch module exactly (f32)."""
    p = perm.astype(jnp.float32) + eps
    t = p * jnp.maximum(jnp.log(p), -100.0)
    entropy_col = -jnp.sum(t, axis=1)
    entropy_row = -jnp.sum(t, axis=2)
    return entropy_col.mean() + entropy_row.mean()


if __name__ == "__main__":
    key = jax.random.PRNGKey(0)

    # Primary small test: batch of soft permutation-like matrices.
    B, N = 2, 16
    logits = jax.random.normal(key, (B, N, N), dtype=jnp.float32)
    perm = jax.nn.softmax(logits, axis=-1)

    loss = jax.block_until_ready(permutation_matrix_penalty(perm))
    ref = _reference(perm)
    assert jnp.allclose(loss, ref, rtol=1e-5, atol=1e-5), (loss, ref)

    # Second check: awkward (non-divisible) shape exercising the fallback
    # (B, N*N) layout.
    B2, N2 = 3, 20
    logits2 = jax.random.normal(jax.random.PRNGKey(1), (B2, N2, N2), dtype=jnp.float32)
    perm2 = jax.nn.softmax(logits2, axis=-1)
    loss2 = jax.block_until_ready(permutation_matrix_penalty(perm2))
    ref2 = _reference(perm2)
    assert jnp.allclose(loss2, ref2, rtol=1e-5, atol=1e-5), (loss2, ref2)

    # Third check: larger shape exercising multi-tile grid + masked last tile.
    B3, N3 = 36, 96
    logits3 = jax.random.normal(jax.random.PRNGKey(2), (B3, N3, N3), dtype=jnp.float32)
    perm3 = jax.nn.softmax(logits3, axis=-1)
    loss3 = jax.block_until_ready(permutation_matrix_penalty(perm3))
    ref3 = _reference(perm3)
    assert jnp.allclose(loss3, ref3, rtol=1e-5, atol=1e-5), (loss3, ref3)

    print("KERNEL_OK")
</pallas_src>

<mosaic_0001>
module attributes {stable_mosaic.version = 11 : i64} {
  func.func @_entropy_sum_kernel(%arg0: i32, %arg1: memref<1x512xf32, #tpu.memory_space<vmem>>, %arg2: memref<1x512xf32, #tpu.memory_space<vmem>>) attributes {dimension_semantics = [#tpu.dimension_semantics<parallel>], iteration_bounds = array<i64: 1>, scalar_prefetch = 0 : i64, scratch_operands = 0 : i64, tpu.core_type = #tpu.core_type<tc>, window_params = [{transform_indices = @transform_0, window_bounds = array<i64: 1, 512>}, {transform_indices = @transform_1, window_bounds = array<i64: 1, 512>}]} {
    %c0 = arith.constant 0 : index
    %c0_0 = arith.constant 0 : index
    %0 = vector.load %arg1[%c0, %c0_0] : memref<1x512xf32, #tpu.memory_space<vmem>>, vector<1x512xf32>
    %cst = arith.constant 1.000000e-07 : f32
    %1 = vector.broadcast %cst : f32 to vector<1x512xf32>
    %2 = arith.addf %0, %1 : vector<1x512xf32>
    %3 = math.log %2 : vector<1x512xf32>
    %cst_1 = arith.constant -1.000000e+02 : f32
    %4 = vector.broadcast %cst_1 : f32 to vector<1x512xf32>
    %5 = arith.maximumf %3, %4 : vector<1x512xf32>
    %6 = arith.mulf %2, %5 : vector<1x512xf32>
    %cst_2 = arith.constant dense<0.000000e+00> : vector<512xf32>
    %7 = vector.multi_reduction <add>, %6, %cst_2 [0] : vector<1x512xf32> to vector<512xf32>
    %8 = vector.shape_cast %7 : vector<512xf32> to vector<1x512xf32>
    %c0_3 = arith.constant 0 : index
    %c0_4 = arith.constant 0 : index
    %9 = vector.load %arg2[%c0_3, %c0_4] : memref<1x512xf32, #tpu.memory_space<vmem>>, vector<1x512xf32>
    tpu.vector_store %arg2[%c0_3, %c0_4], %8 {strides = array<i32>} : memref<1x512xf32, #tpu.memory_space<vmem>>, vector<1x512xf32>,
    return
  }
  func.func @transform_0(%arg0: i32) -> (i32, i32) {
    %c0_i32 = arith.constant 0 : i32
    %c0_i32_0 = arith.constant 0 : i32
    return %arg0, %c0_i32 : i32, i32
  }
  func.func @transform_1(%arg0: i32) -> (i32, i32) {
    %c0_i32 = arith.constant 0 : i32
    %c0_i32_0 = arith.constant 0 : i32
    return %arg0, %c0_i32 : i32, i32
  }
}

</mosaic_0001>

<llo_original>
// kernel: tpu_custom_call.1
$region0: #{tpu_custom_call.1}
  #allocation0 [shape = 'u32[]', space=smem, size = 0x4, offset = 0x4, fixed_abs, tag = 'smem constant byte address 0x4 - core index']
  #allocation1 [shape = 'u32[72,128]{1,0:T(1,128)}', space=vmem, size = 0x9000, scoped, tag = 'internal scratch']
  %s0 = inlined_call_operand.hbm [shape: f32[1,512], index: 0, kind: input, shape index: {}]
  %s1 = inlined_call_operand.hbm [shape: f32[1,512], index: 1, kind: output, shape index: {}]
  %s2 = sld [smem:[#allocation0]]
  $region18: #{tpu_custom_call.1} parent=0
    _
  %s4 = ssub.s32 1, %s2
  %s5 = scalar_select 0, %s4, %s2
  $region1: #{tpu_custom_call.1} parent=0
    #allocation2 [shape = 'u8[2048]{0}', space=vmem, size = 0x800, scoped, tag = 'input window, operand 0, single buffered']
    #allocation3 [shape = 's32[1]{0}', space=sflag, size = 0x4, scoped, tag = 'scoped memory for tpu_custom_call.1']
    #allocation4 [shape = 's32[1]{0}', space=sflag, size = 0x4, scoped, tag = 'scoped memory for tpu_custom_call.1']
    #allocation5 [shape = 'u8[2048]{0}', space=vmem, size = 0x800, scoped, tag = 'output window, operand 0, single buffered']
    %6 = vsyncpa [#allocation3], 0
    %7 = vsyncpa [#allocation4], 0
    // Predicated region
    $region2: #{tpu_custom_call.1} parent=1 // pred_check
      _
    $region3: #{tpu_custom_call.1} parent=1 // pred_check_branch
      %9 = sbr.rel (0) target = $region5
    $region4: #{tpu_custom_call.1} parent=1 // pred_region
      %11 = vsyncadd [#allocation3], 0
      %s13 = sshll.u32 %s0, 4
      %s14 = int_to_ptr.hbm [resolvable:$true] %s13
      %s15 = sshll.u32 [#allocation2], 4
      %s16 = int_to_ptr.vmem [resolvable:$true] %s15
      %18 = dma.hbm_to_vmem [thread:$0]  %s14, 64, %s16, [#allocation3]
    $region5: #{tpu_custom_call.1} parent=1 // pred_fallthru
      _
    // Predicated region
    $region6: #{tpu_custom_call.1} parent=1 // pred_check
      _
    $region7: #{tpu_custom_call.1} parent=1 // pred_check_branch
      %20 = sbr.rel (0) target = $region9
    $region8: #{tpu_custom_call.1} parent=1 // pred_region
      %22 = dma.done [#allocation3], 64
    $region9: #{tpu_custom_call.1} parent=1 // pred_fallthru
      _
    %v23 = vld [vmem:[#allocation2] sm:$0xf]
    %v24 = vadd.f32 %v23, 1e-07
    %v25 = vlog2.pop %v24
    %v26 = vmul.f32 %v25, 0.6931472
    %v27 = vmax.f32 %v26, -100.0
    %v28 = vmul.f32 %v24, %v27
    %v29 = vadd.f32 %v28, 0.0
    %v30 = vlaneseq
    %vm31 = vcmp.ge.s32.totalorder %v30, 0
    %vm32 = vcmp.lt.s32.totalorder %v30, 512
    %vm33 = vmand %vm31, %vm32
    %34 = vst.msk [vmem:[#allocation5] sm:$0xf] %vm33, %v29
    // Predicated region
    $region10: #{tpu_custom_call.1} parent=1 // pred_check
      _
    $region11: #{tpu_custom_call.1} parent=1 // pred_check_branch
      %36 = sbr.rel (0) target = $region13
    $region12: #{tpu_custom_call.1} parent=1 // pred_region
      %38 = vsyncadd [#allocation4], 0
      %s40 = sshll.u32 [#allocation5], 4
      %s41 = int_to_ptr.vmem [resolvable:$true] %s40
      %s42 = sshll.u32 %s1, 4
      %s43 = int_to_ptr.hbm [resolvable:$true] %s42
      %45 = dma.vmem_to_hbm [thread:$0]  %s41, 64, %s43, [#allocation4]
    $region13: #{tpu_custom_call.1} parent=1 // pred_fallthru
      _
    // Predicated region
    $region14: #{tpu_custom_call.1} parent=1 // pred_check
      _
    $region15: #{tpu_custom_call.1} parent=1 // pred_check_branch
      %47 = sbr.rel (0) target = $region17
    $region16: #{tpu_custom_call.1} parent=1 // pred_region
      %49 = dma.done [#allocation4], 64
    $region17: #{tpu_custom_call.1} parent=1 // pred_fallthru
      _
    %50 = vsyncpa [#allocation3], 1
    %51 = vsyncpa [#allocation4], 1

</llo_original>
